<compile_context>
chip_gen: v6e
topology: v6e:2x2x1
jax: 0.10.0
libtpu: 0.0.40
codegen_flags: <defaults>
</compile_context>

<pallas_src>
import functools
import math

import jax
import jax.numpy as jnp
from jax.experimental import pallas as pl
from jax.experimental.pallas import tpu as pltpu

_LANE = 128      # vreg lane width (last dim)
_SUBLANE = 8     # vreg sublane width (second-to-last dim)


def _round_up(x, m):
    return ((x + m - 1) // m) * m


def _cdiv(a, b):
    return (a + b - 1) // b


def _tpu_generation():
    try:
        kind = jax.devices()[0].device_kind.lower()
    except Exception:
        return "unknown"
    for tag in ("v7", "v6", "v5", "v4"):
        if tag in kind:
            return tag
    return "unknown"


# Per generation: (scoped-VMEM budget bytes, default batch tile, multi-TensorCore chip)
_GEN_CONFIG = {
    "v7": (56 << 20, 256, True),     # 64 MiB physical VMEM, 2 TCs/chip
    "v6": (100 << 20, 512, False),   # 128 MiB physical VMEM
    "v5": (100 << 20, 512, False),   # 128 MiB physical VMEM
    "v4": (100 << 20, 512, True),    # megacore
    "unknown": (56 << 20, 256, True),  # conservative default
}


# --------------------------------------------------------------------------- #
# Kernels
# --------------------------------------------------------------------------- #
def _fused_mlp_kernel(*refs, num_layers):
    """refs = (x_ref, w0_ref, b0_ref, ..., w_{L-1}_ref, b_{L-1}_ref, o_ref)."""
    x_ref = refs[0]
    o_ref = refs[-1]

    h = x_ref[...].astype(jnp.float32)
    for i in range(num_layers):
        w_ref = refs[1 + 2 * i]                 # bf16, resident in VMEM
        b_ref = refs[2 + 2 * i]                 # f32
        # bf16 MXU operands, f32 accumulation; epilogue in f32 on the VPU.
        h = jnp.dot(h.astype(jnp.bfloat16), w_ref[...],
                    preferred_element_type=jnp.float32)
        h = h + b_ref[...].astype(jnp.float32)
        if i < num_layers - 1:
            h = jnp.maximum(h, 0.0)             # ReLU (dropout == identity in eval)
    # Single cast at the very end; only the final activation is written to HBM.
    o_ref[...] = h.astype(o_ref.dtype)


def _streaming_layer_kernel(x_ref, w_ref, b_ref, o_ref, acc_ref, *, relu):
    """One Linear(+ReLU) layer, weight streamed over (N, K) tiles. Grid = (M, N, K)."""
    k = pl.program_id(2)

    @pl.when(k == 0)
    def _():
        acc_ref[...] = jnp.zeros_like(acc_ref)

    acc_ref[...] += jnp.dot(x_ref[...].astype(jnp.bfloat16), w_ref[...],
                            preferred_element_type=jnp.float32)

    @pl.when(k == pl.num_programs(2) - 1)
    def _():
        h = acc_ref[...] + b_ref[...].astype(jnp.float32)
        if relu:
            h = jnp.maximum(h, 0.0)
        o_ref[...] = h.astype(o_ref.dtype)


# --------------------------------------------------------------------------- #
# Parameter preparation (call once, reuse across forward calls)
# --------------------------------------------------------------------------- #
def prepare_mlp_params(params, *, weight_dtype=jnp.bfloat16):
    """Pad feature dims to multiples of 128 and convert weights to the MXU dtype.

    Do this ONCE (model-load time). The padded bf16 copies are reused by every
    mlp_drop_forward call, so there is no per-call HBM pad/convert traffic.
    Zero-padding of rows/cols (and zero bias lanes) keeps the math exact.
    """
    padded = []
    for w, b in params:
        di, do = w.shape
        di_p, do_p = _round_up(di, _LANE), _round_up(do, _LANE)
        w_p = jnp.pad(w, ((0, di_p - di), (0, do_p - do))).astype(weight_dtype)
        b_p = jnp.pad(jnp.reshape(b, (1, -1)), ((0, 0), (0, do_p - do))).astype(jnp.float32)
        padded.append((w_p, b_p))
    return {
        "layers": padded,
        "in_dim": params[0][0].shape[0],
        "out_dim": params[-1][0].shape[1],
    }


# --------------------------------------------------------------------------- #
# Forward wrappers
# --------------------------------------------------------------------------- #
def _fused_forward(x_p, layers, block_b, vmem_limit):
    B_pad, in_pad = x_p.shape
    out_pad = layers[-1][0].shape[1]
    num_layers = len(layers)

    in_specs = [pl.BlockSpec((block_b, in_pad), lambda i: (i, 0))]
    flat_args = [x_p]
    for w_p, b_p in layers:
        # Pinned (constant index_map) + single-buffered: weights stay resident in
        # VMEM; no second pipeline buffer is allocated for them.
        in_specs.append(pl.BlockSpec(w_p.shape, lambda i: (0, 0),
                                     pipeline_mode=pl.Buffered(1)))
        in_specs.append(pl.BlockSpec(b_p.shape, lambda i: (0, 0),
                                     pipeline_mode=pl.Buffered(1)))
        flat_args.extend((w_p, b_p))

    return pl.pallas_call(
        functools.partial(_fused_mlp_kernel, num_layers=num_layers),
        out_shape=jax.ShapeDtypeStruct((B_pad, out_pad), x_p.dtype),
        grid=(B_pad // block_b,),
        in_specs=in_specs,
        out_specs=pl.BlockSpec((block_b, out_pad), lambda i: (i, 0)),
        compiler_params=pltpu.CompilerParams(
            dimension_semantics=("parallel",),      # shard batch across TCs
            vmem_limit_bytes=vmem_limit),
    )(*flat_args)


def _streaming_forward(x_p, layers, block_b, vmem_budget):
    """Fallback when pinned weights would not fit VMEM (mainly v7x / large layers)."""
    h = x_p
    num_layers = len(layers)
    for li, (w_p, b_p) in enumerate(layers):
        relu = li < num_layers - 1
        K_pad, N_pad = w_p.shape
        M_pad = h.shape[0]
        tm = block_b
        tk = math.gcd(K_pad, 512)   # padded dims are multiples of 128
        tn = math.gcd(N_pad, 512)

        est = (2 * tm * tk * h.dtype.itemsize          # x tiles (double-buffered)
               + 2 * tk * tn * w_p.dtype.itemsize      # weight tiles
               + 2 * tm * tn * h.dtype.itemsize        # output tiles
               + tm * tn * 4                           # f32 accumulator scratch
               + 2 * tn * 4)                           # bias tiles
        vmem_limit = min(vmem_budget, max(32 << 20, int(est * 1.5) + (1 << 20)))

        h = pl.pallas_call(
            functools.partial(_streaming_layer_kernel, relu=relu),
            out_shape=jax.ShapeDtypeStruct((M_pad, N_pad), x_p.dtype),
            grid=(M_pad // tm, N_pad // tn, K_pad // tk),
            in_specs=[
                pl.BlockSpec((tm, tk), lambda i, j, k: (i, k)),
                pl.BlockSpec((tk, tn), lambda i, j, k: (k, j)),
                pl.BlockSpec((1, tn), lambda i, j, k: (0, j)),
            ],
            out_specs=pl.BlockSpec((tm, tn), lambda i, j, k: (i, j)),
            scratch_shapes=[pltpu.VMEM((tm, tn), jnp.float32)],
            compiler_params=pltpu.CompilerParams(
                dimension_semantics=("parallel", "parallel", "arbitrary"),
                vmem_limit_bytes=vmem_limit),
        )(h, w_p, b_p)
    return h


def mlp_drop_forward(x, prepared, *, block_b=None, mode="auto"):
    """Fused MLP forward.

    x: (B, in_dim); prepared: output of prepare_mlp_params. Returns (B, out_dim).
    mode: "auto" | "fused" | "streaming".
    """
    layers = prepared["layers"]
    in_dim, out_dim = prepared["in_dim"], prepared["out_dim"]
    B = x.shape[0]

    gen = _tpu_generation()
    vmem_budget, default_block_b, multi_tc = _GEN_CONFIG.get(gen, _GEN_CONFIG["unknown"])

    in_pad = layers[0][0].shape[0]
    out_pad = layers[-1][0].shape[1]
    act_bytes = x.dtype.itemsize

    # --- batch tile selection (generation aware) ------------------------------
    if block_b is None:
        block_b = default_block_b if B >= default_block_b else _round_up(B, _SUBLANE)
        if multi_tc and _cdiv(B, block_b) < 2 and B > _SUBLANE:
            # v7x / megacore: make sure the "parallel" batch axis has >= 2 steps
            # so both TensorCores get work.
            block_b = _round_up(_cdiv(B, 2), _SUBLANE)
    B_pad = _round_up(B, block_b)
    x_p = jnp.pad(x, ((0, B_pad - B), (0, in_pad - in_dim)))

    # --- VMEM footprint estimate + fused-vs-streaming decision ----------------
    weight_bytes = sum(w.size * w.dtype.itemsize + b.size * b.dtype.itemsize
                       for w, b in layers)                  # Buffered(1): one copy each
    max_feat = max([in_pad] + [w.shape[1] for w, _ in layers])
    act_stream = 2 * block_b * (in_pad + out_pad) * act_bytes   # double-buffered I/O
    intermediates = 3 * block_b * max_feat * 4                  # f32 h + bf16 copy + slack
    fused_est = weight_bytes + act_stream + intermediates
    vmem_limit = min(vmem_budget, max(32 << 20, int(fused_est * 1.25) + (1 << 20)))

    if mode == "auto":
        mode = "fused" if fused_est <= vmem_budget else "streaming"

    if mode == "fused":
        out_padded = _fused_forward(x_p, layers, block_b, vmem_limit)
    else:
        out_padded = _streaming_forward(x_p, layers, block_b, vmem_budget)

    return out_padded[:B, :out_dim]


# --------------------------------------------------------------------------- #
# Init + reference
# --------------------------------------------------------------------------- #
def init_mlp_params(key, input_size, hidden_layers, out_size, dtype=jnp.float32):
    """Xavier-uniform weights (matching torch.nn.init.xavier_uniform), zero biases."""
    sizes = [input_size] + list(hidden_layers) + [out_size]
    params = []
    for in_dim, out_dim in zip(sizes[:-1], sizes[1:]):
        key, sub = jax.random.split(key)
        bound = (6.0 / (in_dim + out_dim)) ** 0.5
        # Stored directly as (in, out) == W_torch.T ; same distribution.
        w = jax.random.uniform(sub, (in_dim, out_dim), dtype=dtype,
                               minval=-bound, maxval=bound)
        b = jnp.zeros((1, out_dim), dtype=dtype)
        params.append((w, b))
    return params


def mlp_drop_reference(x, params):
    """Plain-JAX (f32) reference for sanity checking."""
    for w, b in params[:-1]:
        x = jnp.maximum(x @ w + b, 0.0)
    w, b = params[-1]
    return x @ w + b


if __name__ == "__main__":
    key = jax.random.PRNGKey(0)
    k_x, k_p = jax.random.split(key)

    batch = 8
    input_size = 32
    hidden_layers = [64, 64]
    out_size = 16

    x = jax.random.normal(k_x, (batch, input_size), dtype=jnp.float32)
    params = init_mlp_params(k_p, input_size, hidden_layers, out_size)
    prepared = prepare_mlp_params(params)          # pad + bf16 convert ONCE

    ref = mlp_drop_reference(x, params)

    # Fused (weights-resident) path — the normal case.
    out = jax.block_until_ready(mlp_drop_forward(x, prepared, mode="fused"))
    assert out.shape == (batch, out_size), out.shape
    # Tolerance loosened vs f32 reference because MXU operands are bf16.
    assert jnp.allclose(out, ref, atol=3e-2, rtol=3e-2), "fused mismatch vs reference"

    # Streaming fallback path (the large-model / v7x VMEM guard) — exercised too.
    out_s = jax.block_until_ready(mlp_drop_forward(x, prepared, mode="streaming"))
    assert out_s.shape == (batch, out_size), out_s.shape
    assert jnp.allclose(out_s, ref, atol=3e-2, rtol=3e-2), "streaming mismatch vs reference"

    print("KERNEL_OK")
</pallas_src>

<mosaic_0001>
module attributes {stable_mosaic.version = 11 : i64} {
  func.func @_fused_mlp_kernel(%arg0: i32, %arg1: memref<8x128xf32, #tpu.memory_space<vmem>>, %arg2: memref<128x128xbf16, #tpu.memory_space<vmem>>, %arg3: memref<1x128xf32, #tpu.memory_space<vmem>>, %arg4: memref<128x128xbf16, #tpu.memory_space<vmem>>, %arg5: memref<1x128xf32, #tpu.memory_space<vmem>>, %arg6: memref<128x128xbf16, #tpu.memory_space<vmem>>, %arg7: memref<1x128xf32, #tpu.memory_space<vmem>>, %arg8: memref<8x128xf32, #tpu.memory_space<vmem>>) attributes {dimension_semantics = [#tpu.dimension_semantics<parallel>], iteration_bounds = array<i64: 1>, scalar_prefetch = 0 : i64, scratch_operands = 0 : i64, tpu.core_type = #tpu.core_type<tc>, window_params = [{transform_indices = @transform_0, window_bounds = array<i64: 8, 128>}, {pipeline_mode = #tpu.pipeline_mode<synchronous>, transform_indices = @transform_1, window_bounds = array<i64: 128, 128>}, {pipeline_mode = #tpu.pipeline_mode<synchronous>, transform_indices = @transform_2, window_bounds = array<i64: 1, 128>}, {pipeline_mode = #tpu.pipeline_mode<synchronous>, transform_indices = @transform_3, window_bounds = array<i64: 128, 128>}, {pipeline_mode = #tpu.pipeline_mode<synchronous>, transform_indices = @transform_4, window_bounds = array<i64: 1, 128>}, {pipeline_mode = #tpu.pipeline_mode<synchronous>, transform_indices = @transform_5, window_bounds = array<i64: 128, 128>}, {pipeline_mode = #tpu.pipeline_mode<synchronous>, transform_indices = @transform_6, window_bounds = array<i64: 1, 128>}, {transform_indices = @transform_7, window_bounds = array<i64: 8, 128>}]} {
    %c0 = arith.constant 0 : index
    %c0_0 = arith.constant 0 : index
    %0 = vector.load %arg1[%c0, %c0_0] : memref<8x128xf32, #tpu.memory_space<vmem>>, vector<8x128xf32>
    %1 = arith.truncf %0 : vector<8x128xf32> to vector<8x128xbf16>
    %c0_1 = arith.constant 0 : index
    %c0_2 = arith.constant 0 : index
    %2 = vector.load %arg2[%c0_1, %c0_2] : memref<128x128xbf16, #tpu.memory_space<vmem>>, vector<128x128xbf16>
    %cst = arith.constant dense<0.000000e+00> : vector<8x128xf32>
    %3 = tpu.matmul %1, %2, %cst {dimension_numbers = #tpu.dot_dimension_numbers<[1], [0], [0], [1], [0, 0, 1, 1], [], []>} : vector<8x128xbf16>, vector<128x128xbf16>, vector<8x128xf32> -> vector<8x128xf32>
    %c0_3 = arith.constant 0 : index
    %c0_4 = arith.constant 0 : index
    %4 = vector.load %arg3[%c0_3, %c0_4] : memref<1x128xf32, #tpu.memory_space<vmem>>, vector<1x128xf32>
    %5 = vector.broadcast %4 : vector<1x128xf32> to vector<8x128xf32>
    %6 = arith.addf %3, %5 : vector<8x128xf32>
    %cst_5 = arith.constant 0.000000e+00 : f32
    %7 = vector.broadcast %cst_5 : f32 to vector<8x128xf32>
    %8 = arith.maximumf %6, %7 : vector<8x128xf32>
    %9 = arith.truncf %8 : vector<8x128xf32> to vector<8x128xbf16>
    %c0_6 = arith.constant 0 : index
    %c0_7 = arith.constant 0 : index
    %10 = vector.load %arg4[%c0_6, %c0_7] : memref<128x128xbf16, #tpu.memory_space<vmem>>, vector<128x128xbf16>
    %cst_8 = arith.constant dense<0.000000e+00> : vector<8x128xf32>
    %11 = tpu.matmul %9, %10, %cst_8 {dimension_numbers = #tpu.dot_dimension_numbers<[1], [0], [0], [1], [0, 0, 1, 1], [], []>} : vector<8x128xbf16>, vector<128x128xbf16>, vector<8x128xf32> -> vector<8x128xf32>
    %c0_9 = arith.constant 0 : index
    %c0_10 = arith.constant 0 : index
    %12 = vector.load %arg5[%c0_9, %c0_10] : memref<1x128xf32, #tpu.memory_space<vmem>>, vector<1x128xf32>
    %13 = vector.broadcast %12 : vector<1x128xf32> to vector<8x128xf32>
    %14 = arith.addf %11, %13 : vector<8x128xf32>
    %cst_11 = arith.constant 0.000000e+00 : f32
    %15 = vector.broadcast %cst_11 : f32 to vector<8x128xf32>
    %16 = arith.maximumf %14, %15 : vector<8x128xf32>
    %17 = arith.truncf %16 : vector<8x128xf32> to vector<8x128xbf16>
    %c0_12 = arith.constant 0 : index
    %c0_13 = arith.constant 0 : index
    %18 = vector.load %arg6[%c0_12, %c0_13] : memref<128x128xbf16, #tpu.memory_space<vmem>>, vector<128x128xbf16>
    %cst_14 = arith.constant dense<0.000000e+00> : vector<8x128xf32>
    %19 = tpu.matmul %17, %18, %cst_14 {dimension_numbers = #tpu.dot_dimension_numbers<[1], [0], [0], [1], [0, 0, 1, 1], [], []>} : vector<8x128xbf16>, vector<128x128xbf16>, vector<8x128xf32> -> vector<8x128xf32>
    %c0_15 = arith.constant 0 : index
    %c0_16 = arith.constant 0 : index
    %20 = vector.load %arg7[%c0_15, %c0_16] : memref<1x128xf32, #tpu.memory_space<vmem>>, vector<1x128xf32>
    %21 = vector.broadcast %20 : vector<1x128xf32> to vector<8x128xf32>
    %22 = arith.addf %19, %21 : vector<8x128xf32>
    %c0_17 = arith.constant 0 : index
    %c0_18 = arith.constant 0 : index
    %23 = vector.load %arg8[%c0_17, %c0_18] : memref<8x128xf32, #tpu.memory_space<vmem>>, vector<8x128xf32>
    tpu.vector_store %arg8[%c0_17, %c0_18], %22 {strides = array<i32>} : memref<8x128xf32, #tpu.memory_space<vmem>>, vector<8x128xf32>,
    return
  }
  func.func @transform_0(%arg0: i32) -> (i32, i32) {
    %c0_i32 = arith.constant 0 : i32
    %c0_i32_0 = arith.constant 0 : i32
    return %arg0, %c0_i32 : i32, i32
  }
  func.func @transform_1(%arg0: i32) -> (i32, i32) {
    %c0_i32 = arith.constant 0 : i32
    %c0_i32_0 = arith.constant 0 : i32
    %c0_i32_1 = arith.constant 0 : i32
    return %c0_i32, %c0_i32_0 : i32, i32
  }
  func.func @transform_2(%arg0: i32) -> (i32, i32) {
    %c0_i32 = arith.constant 0 : i32
    %c0_i32_0 = arith.constant 0 : i32
    %c0_i32_1 = arith.constant 0 : i32
    return %c0_i32, %c0_i32_0 : i32, i32
  }
  func.func @transform_3(%arg0: i32) -> (i32, i32) {
    %c0_i32 = arith.constant 0 : i32
    %c0_i32_0 = arith.constant 0 : i32
    %c0_i32_1 = arith.constant 0 : i32
    return %c0_i32, %c0_i32_0 : i32, i32
  }
  func.func @transform_4(%arg0: i32) -> (i32, i32) {
    %c0_i32 = arith.constant 0 : i32
    %c0_i32_0 = arith.constant 0 : i32
    %c0_i32_1 = arith.constant 0 : i32
    return %c0_i32, %c0_i32_0 : i32, i32
  }
  func.func @transform_5(%arg0: i32) -> (i32, i32) {
    %c0_i32 = arith.constant 0 : i32
    %c0_i32_0 = arith.constant 0 : i32
    %c0_i32_1 = arith.constant 0 : i32
    return %c0_i32, %c0_i32_0 : i32, i32
  }
  func.func @transform_6(%arg0: i32) -> (i32, i32) {
    %c0_i32 = arith.constant 0 : i32
    %c0_i32_0 = arith.constant 0 : i32
    %c0_i32_1 = arith.constant 0 : i32
    return %c0_i32, %c0_i32_0 : i32, i32
  }
  func.func @transform_7(%arg0: i32) -> (i32, i32) {
    %c0_i32 = arith.constant 0 : i32
    %c0_i32_0 = arith.constant 0 : i32
    return %arg0, %c0_i32 : i32, i32
  }
}

</mosaic_0001>

<llo_original>
// kernel: tpu_custom_call.1
$region0: #{tpu_custom_call.1}
  #allocation0 [shape = 'u32[]', space=smem, size = 0x4, offset = 0x4, fixed_abs, tag = 'smem constant byte address 0x4 - core index']
  #allocation1 [shape = 'u32[144,128]{1,0:T(1,128)}', space=vmem, size = 0x12000, scoped, tag = 'internal scratch']
  %s0 = inlined_call_operand.hbm [shape: f32[8,128], index: 0, kind: input, shape index: {}]
  %s1 = inlined_call_operand.hbm [shape: bf16[128,128], index: 1, kind: input, shape index: {}]
  %s2 = inlined_call_operand.vmem [shape: f32[1,128], index: 2, kind: input, shape index: {}]
  %s3 = inlined_call_operand.hbm [shape: bf16[128,128], index: 3, kind: input, shape index: {}]
  %s4 = inlined_call_operand.vmem [shape: f32[1,128], index: 4, kind: input, shape index: {}]
  %s5 = inlined_call_operand.hbm [shape: bf16[128,128], index: 5, kind: input, shape index: {}]
  %s6 = inlined_call_operand.vmem [shape: f32[1,128], index: 6, kind: input, shape index: {}]
  %s7 = inlined_call_operand.hbm [shape: f32[8,128], index: 7, kind: output, shape index: {}]
  %s8 = sld [smem:[#allocation0]]
  $region54: #{tpu_custom_call.1} parent=0
    _
  %s10 = ssub.s32 1, %s8
  %s11 = scalar_select 0, %s10, %s8
  $region1: #{tpu_custom_call.1} parent=0
    #allocation2 [shape = 'u8[4096]{0}', space=vmem, size = 0x1000, scoped, tag = 'input window, operand 0, single buffered']
    #allocation3 [shape = 's32[1]{0}', space=sflag, size = 0x4, scoped, tag = 'scoped memory for tpu_custom_call.1']
    #allocation4 [shape = 's32[1]{0}', space=sflag, size = 0x4, scoped, tag = 'scoped memory for tpu_custom_call.1']
    #allocation5 [shape = 'u8[32768]{0}', space=vmem, size = 0x8000, scoped, tag = 'input window, operand 1, single buffered']
    #allocation6 [shape = 's32[1]{0}', space=sflag, size = 0x4, scoped, tag = 'scoped memory for tpu_custom_call.1']
    #allocation7 [shape = 'u8[32768]{0}', space=vmem, size = 0x8000, scoped, tag = 'input window, operand 3, single buffered']
    #allocation8 [shape = 'u8[32768]{0}', space=vmem, size = 0x8000, scoped, tag = 'input window, operand 5, single buffered']
    #allocation9 [shape = 's32[1]{0}', space=sflag, size = 0x4, scoped, tag = 'scoped memory for tpu_custom_call.1']
    #allocation10 [shape = 'u8[4096]{0}', space=vmem, size = 0x1000, scoped, tag = 'output window, operand 0, single buffered']
    %12 = vsyncpa [#allocation3], 0
    %13 = vsyncpa [#allocation6], 0
    %14 = vsyncpa [#allocation9], 0
    %15 = vsyncpa [#allocation4], 0
    // Predicated region
    $region2: #{tpu_custom_call.1} parent=1 // pred_check
      _
    $region3: #{tpu_custom_call.1} parent=1 // pred_check_branch
      %17 = sbr.rel (0) target = $region5
    $region4: #{tpu_custom_call.1} parent=1 // pred_region
      %s19 = ssub.s32 128, 128
      %20 = vsyncadd [#allocation3], %s19
      %s22 = sshll.u32 [#allocation2], 4
      %s23 = int_to_ptr.vmem [resolvable:$true] %s22
      %25 = dma.hbm_to_vmem [thread:$0]  %s0, 128, %s23, [#allocation3]
    $region5: #{tpu_custom_call.1} parent=1 // pred_fallthru
      _
    // Predicated region
    $region6: #{tpu_custom_call.1} parent=1 // pred_check
      _
    $region7: #{tpu_custom_call.1} parent=1 // pred_check_branch
      %27 = sbr.rel (0) target = $region9
    $region8: #{tpu_custom_call.1} parent=1 // pred_region
      %s29 = ssub.s32 1024, 1024
      %30 = vsyncadd [#allocation6], %s29
      %s31 = sshll.u32 [#allocation5], 4
      %s32 = int_to_ptr.vmem [resolvable:$true] %s31
      %37 = dma.hbm_to_vmem [thread:$0]  %s1, 1024, %s32, [#allocation6], 64, 64, 4
    $region9: #{tpu_custom_call.1} parent=1 // pred_fallthru
      _
    // Predicated region
    $region10: #{tpu_custom_call.1} parent=1 // pred_check
      _
    $region11: #{tpu_custom_call.1} parent=1 // pred_check_branch
      %39 = sbr.rel (0) target = $region13
    $region12: #{tpu_custom_call.1} parent=1 // pred_region
      _
    $region13: #{tpu_custom_call.1} parent=1 // pred_fallthru
      _
    // Predicated region
    $region14: #{tpu_custom_call.1} parent=1 // pred_check
      _
    $region15: #{tpu_custom_call.1} parent=1 // pred_check_branch
      %41 = sbr.rel (0) target = $region17
    $region16: #{tpu_custom_call.1} parent=1 // pred_region
      %s43 = ssub.s32 1024, 1024
      %44 = vsyncadd [#allocation6], %s43
      %s45 = sshll.u32 [#allocation7], 4
      %s46 = int_to_ptr.vmem [resolvable:$true] %s45
      %51 = dma.hbm_to_vmem [thread:$0]  %s3, 1024, %s46, [#allocation6], 64, 64, 4
    $region17: #{tpu_custom_call.1} parent=1 // pred_fallthru
      _
    // Predicated region
    $region18: #{tpu_custom_call.1} parent=1 // pred_check
      _
    $region19: #{tpu_custom_call.1} parent=1 // pred_check_branch
      %53 = sbr.rel (0) target = $region21
    $region20: #{tpu_custom_call.1} parent=1 // pred_region
      _
    $region21: #{tpu_custom_call.1} parent=1 // pred_fallthru
      _
    // Predicated region
    $region22: #{tpu_custom_call.1} parent=1 // pred_check
      _
    $region23: #{tpu_custom_call.1} parent=1 // pred_check_branch
      %55 = sbr.rel (0) target = $region25
    $region24: #{tpu_custom_call.1} parent=1 // pred_region
      %s57 = ssub.s32 1024, 1024
      %58 = vsyncadd [#allocation9], %s57
      %s59 = sshll.u32 [#allocation8], 4
      %s60 = int_to_ptr.vmem [resolvable:$true] %s59
      %65 = dma.hbm_to_vmem [thread:$0]  %s5, 1024, %s60, [#allocation9], 64, 64, 4
    $region25: #{tpu_custom_call.1} parent=1 // pred_fallthru
      _
    // Predicated region
    $region26: #{tpu_custom_call.1} parent=1 // pred_check
      _
    $region27: #{tpu_custom_call.1} parent=1 // pred_check_branch
      %67 = sbr.rel (0) target = $region29
    $region28: #{tpu_custom_call.1} parent=1 // pred_region
      _
    $region29: #{tpu_custom_call.1} parent=1 // pred_fallthru
      _
    // Predicated region
    $region30: #{tpu_custom_call.1} parent=1 // pred_check
      _
    $region31: #{tpu_custom_call.1} parent=1 // pred_check_branch
      %69 = sbr.rel (0) target = $region33
    $region32: #{tpu_custom_call.1} parent=1 // pred_region
      %70 = dma.done [#allocation3], 128
    $region33: #{tpu_custom_call.1} parent=1 // pred_fallthru
      _
    // Predicated region
    $region34: #{tpu_custom_call.1} parent=1 // pred_check
      _
    $region35: #{tpu_custom_call.1} parent=1 // pred_check_branch
      %72 = sbr.rel (0) target = $region37
    $region36: #{tpu_custom_call.1} parent=1 // pred_region
      %73 = dma.done [#allocation6], 1024
    $region37: #{tpu_custom_call.1} parent=1 // pred_fallthru
      _
    // Predicated region
    $region38: #{tpu_custom_call.1} parent=1 // pred_check
      _
    $region39: #{tpu_custom_call.1} parent=1 // pred_check_branch
      %75 = sbr.rel (0) target = $region41
    $region40: #{tpu_custom_call.1} parent=1 // pred_region
      %76 = dma.done [#allocation6], 1024
    $region41: #{tpu_custom_call.1} parent=1 // pred_fallthru
      _
    // Predicated region
    $region42: #{tpu_custom_call.1} parent=1 // pred_check
      _
    $region43: #{tpu_custom_call.1} parent=1 // pred_check_branch
      %78 = sbr.rel (0) target = $region45
    $region44: #{tpu_custom_call.1} parent=1 // pred_region
      %79 = dma.done [#allocation9], 1024
    $region45: #{tpu_custom_call.1} parent=1 // pred_fallthru
      _
    %v81 = vld [vmem:[#allocation2] sm:$0xff]
    %v82 = vpack.c.bf16 %v81, %v81
    %v83 = vld [vmem:[#allocation5] sm:$0xf]
    %v84 = vld [vmem:[#allocation5 + $0x4] sm:$0xf]
    %v85 = vld [vmem:[#allocation5 + $0x8] sm:$0xf]
    %v86 = vld [vmem:[#allocation5 + $0xc] sm:$0xf]
    %v87 = vld [vmem:[#allocation5 + $0x10] sm:$0xf]
    %v88 = vld [vmem:[#allocation5 + $0x14] sm:$0xf]
    %v89 = vld [vmem:[#allocation5 + $0x18] sm:$0xf]
    %v90 = vld [vmem:[#allocation5 + $0x1c] sm:$0xf]
    %v91 = vld [vmem:[#allocation5 + $0x20] sm:$0xf]
    %v92 = vld [vmem:[#allocation5 + $0x24] sm:$0xf]
    %v93 = vld [vmem:[#allocation5 + $0x28] sm:$0xf]
    %v94 = vld [vmem:[#allocation5 + $0x2c] sm:$0xf]
    %v95 = vld [vmem:[#allocation5 + $0x30] sm:$0xf]
    %v96 = vld [vmem:[#allocation5 + $0x34] sm:$0xf]
    %v97 = vld [vmem:[#allocation5 + $0x38] sm:$0xf]
    %v98 = vld [vmem:[#allocation5 + $0x3c] sm:$0xf]
    %v99 = vld [vmem:[%s2] sm:$0x1]
    %v101 = vlaneseq
    %v102 = vshrl.u32 %v101, 7
    %v103 = vsub.s32 0, %v102
    %v104 = vrot.slane %v99, %v103
    %v122 = vunpack.c.l.b16 %v83
    %v123 = vunpack.c.l.b16 %v84
    %v124 = vunpack.c.l.b16 %v85
    %v125 = vunpack.c.l.b16 %v86
    %v126 = vunpack.c.l.b16 %v87
    %v127 = vunpack.c.l.b16 %v88
    %v128 = vunpack.c.l.b16 %v89
    %v129 = vunpack.c.l.b16 %v90
    %v130 = vunpack.c.l.b16 %v91
    %v131 = vunpack.c.l.b16 %v92
    %v132 = vunpack.c.l.b16 %v93
    %v133 = vunpack.c.l.b16 %v94
    %v134 = vunpack.c.l.b16 %v95
    %v135 = vunpack.c.l.b16 %v96
    %v136 = vunpack.c.l.b16 %v97
    %v137 = vunpack.c.l.b16 %v98
    %v138 = vpack.c.b16 %v123, %v122
    %v139 = vpack.c.b16 %v125, %v124
    %v140 = vpack.c.b16 %v127, %v126
    %v141 = vpack.c.b16 %v129, %v128
    %v142 = vpack.c.b16 %v131, %v130
    %v143 = vpack.c.b16 %v133, %v132
    %v144 = vpack.c.b16 %v135, %v134
    %v145 = vpack.c.b16 %v137, %v136
    %154 = vmatprep.subr.bf16.mxu0 0
    %155 = vmatpush1.bf16.msra.mxu0 %v145
    %156 = vmatprep.subr.bf16.mxu0 0
    %157 = vmatpush1.bf16.msra.mxu0 %v144
    %158 = vmatprep.subr.bf16.mxu0 0
    %159 = vmatpush1.bf16.msra.mxu0 %v143
    %160 = vmatprep.subr.bf16.mxu0 0
    %161 = vmatpush1.bf16.msra.mxu0 %v142
    %162 = vmatprep.subr.bf16.mxu0 0
    %163 = vmatpush1.bf16.msra.mxu0 %v141
    %164 = vmatprep.subr.bf16.mxu0 0
    %165 = vmatpush1.bf16.msra.mxu0 %v140
    %166 = vmatprep.subr.bf16.mxu0 0
    %167 = vmatpush1.bf16.msra.mxu0 %v139
    %168 = vmatprep.subr.bf16.mxu0 0
    %169 = vmatpush1.bf16.msra.mxu0 %v138
    %170 = vmatprep.subr.bf16.mxu0 0
    %171 = vmatpush2.bf16.msra.mxu0 0
    %172 = vmatprep.subr.bf16.mxu0 0
    %173 = vmatpush2.bf16.msra.mxu0 0
    %174 = vmatprep.subr.bf16.mxu0 0
    %175 = vmatpush2.bf16.msra.mxu0 0
    %176 = vmatprep.subr.bf16.mxu0 0
    %177 = vmatpush2.bf16.msra.mxu0 0
    %178 = vmatprep.subr.bf16.mxu0 0
    %179 = vmatpush2.bf16.msra.mxu0 0
    %180 = vmatprep.subr.bf16.mxu0 0
    %181 = vmatpush2.bf16.msra.mxu0 0
    %182 = vmatprep.subr.bf16.mxu0 0
    %183 = vmatpush2.bf16.msra.mxu0 0
    %184 = vmatprep.subr.bf16.mxu0 0
    %185 = vmatpush2.bf16.msra.mxu0 0
    %186 = vmatprep.mubr.bf16.mxu0 0
    %187 = vmatmul.mubr.bf16.gmra.mxu0 %v82
    %v188 = vpop.f32.mrf.mxu0
    %v189 = vadd.f32 %v104, %v188
    %v190 = vpop.f32.mrf.mxu0
    %v191 = vpop.f32.mrf.mxu0
    %v192 = vpop.f32.mrf.mxu0
    %193 = vdwg.mxu0
    %v194 = vmax.f32 %v189, 0.0
    %v195 = vpack.c.bf16 %v194, %v194
    %v196 = vld [vmem:[#allocation7] sm:$0xf]
    %v197 = vld [vmem:[#allocation7 + $0x4] sm:$0xf]
    %v198 = vld [vmem:[#allocation7 + $0x8] sm:$0xf]
    %v199 = vld [vmem:[#allocation7 + $0xc] sm:$0xf]
    %v200 = vld [vmem:[#allocation7 + $0x10] sm:$0xf]
    %v201 = vld [vmem:[#allocation7 + $0x14] sm:$0xf]
    %v202 = vld [vmem:[#allocation7 + $0x18] sm:$0xf]
    %v203 = vld [vmem:[#allocation7 + $0x1c] sm:$0xf]
    %v204 = vld [vmem:[#allocation7 + $0x20] sm:$0xf]
    %v205 = vld [vmem:[#allocation7 + $0x24] sm:$0xf]
    %v206 = vld [vmem:[#allocation7 + $0x28] sm:$0xf]
    %v207 = vld [vmem:[#allocation7 + $0x2c] sm:$0xf]
    %v208 = vld [vmem:[#allocation7 + $0x30] sm:$0xf]
    %v209 = vld [vmem:[#allocation7 + $0x34] sm:$0xf]
    %v210 = vld [vmem:[#allocation7 + $0x38] sm:$0xf]
    %v211 = vld [vmem:[#allocation7 + $0x3c] sm:$0xf]
    %v212 = vld [vmem:[%s4] sm:$0x1]
    %v214 = vlaneseq
    %v215 = vshrl.u32 %v214, 7
    %v216 = vsub.s32 0, %v215
    %v217 = vrot.slane %v212, %v216
    %v235 = vunpack.c.l.b16 %v196
    %v236 = vunpack.c.l.b16 %v197
    %v237 = vunpack.c.l.b16 %v198
    %v238 = vunpack.c.l.b16 %v199
    %v239 = vunpack.c.l.b16 %v200
    %v240 = vunpack.c.l.b16 %v201
    %v241 = vunpack.c.l.b16 %v202
    %v242 = vunpack.c.l.b16 %v203
    %v243 = vunpack.c.l.b16 %v204
    %v244 = vunpack.c.l.b16 %v205
    %v245 = vunpack.c.l.b16 %v206
    %v246 = vunpack.c.l.b16 %v207
    %v247 = vunpack.c.l.b16 %v208
    %v248 = vunpack.c.l.b16 %v209
    %v249 = vunpack.c.l.b16 %v210
    %v250 = vunpack.c.l.b16 %v211
    %v251 = vpack.c.b16 %v236, %v235
    %v252 = vpack.c.b16 %v238, %v237
    %v253 = vpack.c.b16 %v240, %v239
    %v254 = vpack.c.b16 %v242, %v241
    %v255 = vpack.c.b16 %v244, %v243
    %v256 = vpack.c.b16 %v246, %v245
    %v257 = vpack.c.b16 %v248, %v247
    %v258 = vpack.c.b16 %v250, %v249
    %267 = vmatprep.subr.bf16.mxu0 0
    %268 = vmatpush1.bf16.msra.mxu0 %v258
    %269 = vmatprep.subr.bf16.mxu0 0
    %270 = vmatpush1.bf16.msra.mxu0 %v257
    %271 = vmatprep.subr.bf16.mxu0 0
    %272 = vmatpush1.bf16.msra.mxu0 %v256
    %273 = vmatprep.subr.bf16.mxu0 0
    %274 = vmatpush1.bf16.msra.mxu0 %v255
    %275 = vmatprep.subr.bf16.mxu0 0
    %276 = vmatpush1.bf16.msra.mxu0 %v254
    %277 = vmatprep.subr.bf16.mxu0 0
    %278 = vmatpush1.bf16.msra.mxu0 %v253
    %279 = vmatprep.subr.bf16.mxu0 0
    %280 = vmatpush1.bf16.msra.mxu0 %v252
    %281 = vmatprep.subr.bf16.mxu0 0
    %282 = vmatpush1.bf16.msra.mxu0 %v251
    %283 = vmatprep.subr.bf16.mxu0 0
    %284 = vmatpush2.bf16.msra.mxu0 0
    %285 = vmatprep.subr.bf16.mxu0 0
    %286 = vmatpush2.bf16.msra.mxu0 0
    %287 = vmatprep.subr.bf16.mxu0 0
    %288 = vmatpush2.bf16.msra.mxu0 0
    %289 = vmatprep.subr.bf16.mxu0 0
    %290 = vmatpush2.bf16.msra.mxu0 0
    %291 = vmatprep.subr.bf16.mxu0 0
    %292 = vmatpush2.bf16.msra.mxu0 0
    %293 = vmatprep.subr.bf16.mxu0 0
    %294 = vmatpush2.bf16.msra.mxu0 0
    %295 = vmatprep.subr.bf16.mxu0 0
    %296 = vmatpush2.bf16.msra.mxu0 0
    %297 = vmatprep.subr.bf16.mxu0 0
    %298 = vmatpush2.bf16.msra.mxu0 0
    %299 = vmatprep.mubr.bf16.mxu0 0
    %300 = vmatmul.mubr.bf16.gmra.mxu0 %v195
    %v301 = vpop.f32.mrf.mxu0
    %v302 = vadd.f32 %v217, %v301
    %v303 = vpop.f32.mrf.mxu0
    %v304 = vpop.f32.mrf.mxu0
    %v305 = vpop.f32.mrf.mxu0
    %306 = vdwg.mxu0
    %v307 = vmax.f32 %v302, 0.0
    %v308 = vpack.c.bf16 %v307, %v307
    %v309 = vld [vmem:[#allocation8] sm:$0xf]
    %v310 = vld [vmem:[#allocation8 + $0x4] sm:$0xf]
    %v311 = vld [vmem:[#allocation8 + $0x8] sm:$0xf]
    %v312 = vld [vmem:[#allocation8 + $0xc] sm:$0xf]
    %v313 = vld [vmem:[#allocation8 + $0x10] sm:$0xf]
    %v314 = vld [vmem:[#allocation8 + $0x14] sm:$0xf]
    %v315 = vld [vmem:[#allocation8 + $0x18] sm:$0xf]
    %v316 = vld [vmem:[#allocation8 + $0x1c] sm:$0xf]
    %v317 = vld [vmem:[#allocation8 + $0x20] sm:$0xf]
    %v318 = vld [vmem:[#allocation8 + $0x24] sm:$0xf]
    %v319 = vld [vmem:[#allocation8 + $0x28] sm:$0xf]
    %v320 = vld [vmem:[#allocation8 + $0x2c] sm:$0xf]
    %v321 = vld [vmem:[#allocation8 + $0x30] sm:$0xf]
    %v322 = vld [vmem:[#allocation8 + $0x34] sm:$0xf]
    %v323 = vld [vmem:[#allocation8 + $0x38] sm:$0xf]
    %v324 = vld [vmem:[#allocation8 + $0x3c] sm:$0xf]
    %v325 = vld [vmem:[%s6] sm:$0x1]
    %v327 = vlaneseq
    %v328 = vshrl.u32 %v327, 7
    %v329 = vsub.s32 0, %v328
    %v330 = vrot.slane %v325, %v329
    %v348 = vunpack.c.l.b16 %v309
    %v349 = vunpack.c.l.b16 %v310
    %v350 = vunpack.c.l.b16 %v311
    %v351 = vunpack.c.l.b16 %v312
    %v352 = vunpack.c.l.b16 %v313
    %v353 = vunpack.c.l.b16 %v314
    %v354 = vunpack.c.l.b16 %v315
    %v355 = vunpack.c.l.b16 %v316
    %v356 = vunpack.c.l.b16 %v317
    %v357 = vunpack.c.l.b16 %v318
    %v358 = vunpack.c.l.b16 %v319
    %v359 = vunpack.c.l.b16 %v320
    %v360 = vunpack.c.l.b16 %v321
    %v361 = vunpack.c.l.b16 %v322
    %v362 = vunpack.c.l.b16 %v323
    %v363 = vunpack.c.l.b16 %v324
    %v364 = vpack.c.b16 %v349, %v348
    %v365 = vpack.c.b16 %v351, %v350
    %v366 = vpack.c.b16 %v353, %v352
    %v367 = vpack.c.b16 %v355, %v354
    %v368 = vpack.c.b16 %v357, %v356
    %v369 = vpack.c.b16 %v359, %v358
    %v370 = vpack.c.b16 %v361, %v360
    %v371 = vpack.c.b16 %v363, %v362
    %380 = vmatprep.subr.bf16.mxu0 0
    %381 = vmatpush1.bf16.msra.mxu0 %v371
    %382 = vmatprep.subr.bf16.mxu0 0
    %383 = vmatpush1.bf16.msra.mxu0 %v370
    %384 = vmatprep.subr.bf16.mxu0 0
    %385 = vmatpush1.bf16.msra.mxu0 %v369
    %386 = vmatprep.subr.bf16.mxu0 0
    %387 = vmatpush1.bf16.msra.mxu0 %v368
    %388 = vmatprep.subr.bf16.mxu0 0
    %389 = vmatpush1.bf16.msra.mxu0 %v367
    %390 = vmatprep.subr.bf16.mxu0 0
    %391 = vmatpush1.bf16.msra.mxu0 %v366
    %392 = vmatprep.subr.bf16.mxu0 0
    %393 = vmatpush1.bf16.msra.mxu0 %v365
    %394 = vmatprep.subr.bf16.mxu0 0
    %395 = vmatpush1.bf16.msra.mxu0 %v364
    %396 = vmatprep.subr.bf16.mxu0 0
    %397 = vmatpush2.bf16.msra.mxu0 0
    %398 = vmatprep.subr.bf16.mxu0 0
    %399 = vmatpush2.bf16.msra.mxu0 0
    %400 = vmatprep.subr.bf16.mxu0 0
    %401 = vmatpush2.bf16.msra.mxu0 0
    %402 = vmatprep.subr.bf16.mxu0 0
    %403 = vmatpush2.bf16.msra.mxu0 0
    %404 = vmatprep.subr.bf16.mxu0 0
    %405 = vmatpush2.bf16.msra.mxu0 0
    %406 = vmatprep.subr.bf16.mxu0 0
    %407 = vmatpush2.bf16.msra.mxu0 0
    %408 = vmatprep.subr.bf16.mxu0 0
    %409 = vmatpush2.bf16.msra.mxu0 0
    %410 = vmatprep.subr.bf16.mxu0 0
    %411 = vmatpush2.bf16.msra.mxu0 0
    %412 = vmatprep.mubr.bf16.mxu0 0
    %413 = vmatmul.mubr.bf16.gmra.mxu0 %v308
    %v414 = vpop.f32.mrf.mxu0
    %v415 = vadd.f32 %v330, %v414
    %v416 = vpop.f32.mrf.mxu0
    %v417 = vpop.f32.mrf.mxu0
    %v418 = vpop.f32.mrf.mxu0
    %419 = vdwg.mxu0
    %420 = vst [vmem:[#allocation10] sm:$0xff] %v415
    // Predicated region
    $region46: #{tpu_custom_call.1} parent=1 // pred_check
      _
    $region47: #{tpu_custom_call.1} parent=1 // pred_check_branch
      %422 = sbr.rel (0) target = $region49
    $region48: #{tpu_custom_call.1} parent=1 // pred_region
      %s424 = ssub.s32 128, 128
      %425 = vsyncadd [#allocation4], %s424
      %s427 = sshll.u32 [#allocation10], 4
      %s428 = int_to_ptr.vmem [resolvable:$true] %s427
      %430 = dma.vmem_to_hbm [thread:$0]  %s428, 128, %s7, [#allocation4]
    $region49: #{tpu_custom_call.1} parent=1 // pred_fallthru
      _
    // Predicated region
    $region50: #{tpu_custom_call.1} parent=1 // pred_check
      _
    $region51: #{tpu_custom_call.1} parent=1 // pred_check_branch
      %432 = sbr.rel (0) target = $region53
    $region52: #{tpu_custom_call.1} parent=1 // pred_region
      %433 = dma.done [#allocation4], 128
    $region53: #{tpu_custom_call.1} parent=1 // pred_fallthru
      _
    %434 = vsyncpa [#allocation3], 1
    %435 = vsyncpa [#allocation6], 1
    %436 = vsyncpa [#allocation9], 1
    %437 = vsyncpa [#allocation4], 1

</llo_original>
